<compile_context>
chip_gen: v5e
topology: v5e:2x2
jax: 0.10.0
libtpu: 0.0.40
codegen_flags: <defaults>
</compile_context>

<pallas_src>
import functools

import jax
import jax.numpy as jnp
from jax import lax
from jax.experimental import pallas as pl
from jax.experimental.pallas import tpu as pltpu


def _round_up(n, m):
    return ((n + m - 1) // m) * m


# --------------------- pltpu.roll direction probe (one-time) -----------------
_ROLL_UP = None


def _roll_shifts_up():
    """Probe whether pltpu.roll(x, +1) moves element i -> i+1 (jnp.roll convention).

    Tiny one-time kernel; makes the lane/sublane realignment shifts robust across
    convention changes between jax versions.
    """
    global _ROLL_UP
    if _ROLL_UP is None:
        def probe(x_ref, o_ref):
            o_ref[...] = pltpu.roll(x_ref[...], 1, axis=1)

        with jax.ensure_compile_time_eval():
            x = lax.broadcasted_iota(jnp.float32, (8, 128), 1)
            y = pl.pallas_call(
                probe, out_shape=jax.ShapeDtypeStruct((8, 128), jnp.float32))(x)
            _ROLL_UP = bool(y[0, 1] == 0.0)
    return _ROLL_UP


# ------------------------------ fused kernel --------------------------------

def _fused_kernel(*refs, hidden, layers, seq_len, batch, batch_pad, cdt, roll_up):
    """Whole-model forward.

    refs layout:
      [0]              x_ref   (T*Bp, F_pad)  time-major input, row t*Bp + b, cdt
      [1 .. layers]    per-layer slab (F_pad_l + 4H + 8, 4H), cdt:
                         rows [0:F_pad_l]          W_ih^T   (gate cols [i, f, o, g])
                         rows [F_pad_l:F_pad_l+4H] W_hh^T zero-row padded (valid 3H:4H)
                         row  [F_pad_l+4H]         gate bias
      [layers+1]       head slab (3H + 8, O_pad), cdt:
                         rows [0:3H] conv-folded taps [W0'; W1'; W2'], row [3H] bias
      [layers+2]       out_ref (Bp, O_pad) f32   (lane-dense store)
    """
    H, T, Bp = hidden, seq_len, batch_pad
    G = 4 * H
    f32 = jnp.float32

    x_ref = refs[0]
    layer_refs = refs[1:1 + layers]
    head_ref = refs[1 + layers]
    out_ref = refs[2 + layers]

    def jroll(v, s, axis):
        # jnp.roll semantics regardless of pltpu.roll's direction convention.
        period = v.shape[axis]
        sh = s % period
        if not roll_up:
            sh = (period - sh) % period
        return v if sh == 0 else pltpu.roll(v, sh, axis=axis)

    # Hoisted gate-lane constants (one vreg each): g lanes are [3H:4H).
    lane = lax.broadcasted_iota(jnp.int32, (Bp, G), 1)
    is_g = lane >= 3 * H
    gate_scale = jnp.where(is_g, 2.0, 1.0)    # tanh(x) = 2*sigmoid(2x) - 1 on g lanes
    gate_shift = jnp.where(is_g, -1.0, 0.0)

    src = x_ref[...]                           # layer-0 input (T*Bp, F_pad), cdt
    h = jnp.zeros((Bp, G), f32)
    for l in range(layers):
        slab = layer_refs[l]
        f_rows = slab.shape[0] - G - 8
        wih = slab[0:f_rows, :]                                # (f_rows, G)  cdt
        whh = slab[f_rows:f_rows + G, :]                       # (G, G)       cdt
        bias = slab[f_rows + G:f_rows + G + 1, :].astype(f32)  # (1, G)

        # Hoisted input projection + bias: one big-M MXU matmul per layer.
        gx = jnp.dot(src.astype(cdt), wih, preferred_element_type=f32) + bias

        # c / h live in lanes [3H:4H); other lanes carry bounded garbage that the
        # zero rows of whh / wih (next layer) ignore.
        c = jnp.zeros((Bp, G), f32)
        h = jnp.zeros((Bp, G), f32)
        hs = []
        for t in range(T):                     # static unroll (T small) for LLO visibility
            gates = gx[t * Bp:(t + 1) * Bp, :] + jnp.dot(
                h.astype(cdt), whh, preferred_element_type=f32)        # (Bp, G) [i f o g]
            # One full-vreg EUP pass for all four gates.
            s = jax.nn.sigmoid(gates * gate_scale)
            act = s * gate_scale + gate_shift
            # Explicit XLU lane rolls: align f / i / o with the cell lanes [3H:4H).
            r_f = jroll(act, 2 * H, 1)
            r_i = jroll(act, 3 * H, 1)
            r_o = jroll(act, H, 1)
            c = r_f * c + r_i * act            # f*c + i*g     (valid in lanes 3H:4H)
            h = r_o * jnp.tanh(c)              # o*tanh(c)     (valid in lanes 3H:4H)
            if l + 1 < layers:
                hs.append(h)
        if l + 1 < layers:
            # Next layer's input: full sequence stays in vregs (T*Bp*G f32 = 32 KiB here).
            src = jnp.concatenate(hs, axis=0)  # (T*Bp, G)

    # ---- head: Conv1d over the *batch* axis (k=3, pad=1) folded into the Linear ----
    h32 = h[:, 3 * H:]                                         # (Bp, H) one-time lane slice
    row = lax.broadcasted_iota(jnp.int32, (Bp, H), 0)
    h_v = jnp.where(row < batch, h32, 0.0)                     # zero the padded batch rows
    h_prev = jnp.where(row >= 1, jroll(h_v, 1, 0), 0.0)
    h_next = jnp.where(row < batch - 1, jroll(h_v, Bp - 1, 0), 0.0)
    head_in = jnp.concatenate([h_prev, h_v, h_next], axis=1)   # (Bp, 3H)

    w_head = head_ref[0:3 * H, :]                              # (3H, O_pad) cdt
    b_head = head_ref[3 * H:3 * H + 1, :].astype(f32)          # (1, O_pad)
    z = jnp.dot(head_in.astype(cdt), w_head, preferred_element_type=f32) + b_head
    out_ref[...] = jnp.where(z >= 0, z, 0.2 * z)               # LeakyReLU(0.2)


# ------------------------------ wrapper --------------------------------------

def _reorder_gate_rows(w):
    """PyTorch gate order [i, f, g, o] (dim 0) -> kernel order [i, f, o, g]."""
    H = w.shape[0] // 4
    return jnp.concatenate([w[:2 * H], w[3 * H:], w[2 * H:3 * H]], axis=0)


def stock_lstm_cnn_forward(x_bti, params, *, compute_dtype=jnp.bfloat16):
    """Pallas implementation of StockLSTMCNN.forward. x_bti: (B, T, input_size)."""
    B, T, F_in = (int(d) for d in x_bti.shape)
    layers = len(params["lstm"])
    H = int(params["lstm"][0][1].shape[1])
    O = int(params["lin_w"].shape[0])
    G = 4 * H
    Bp = _round_up(B, 8)          # full sublane tile -> aligned per-step slices
    Fp = _round_up(F_in, 8)
    Op = _round_up(O, 128)        # lane-dense output store
    cdt = compute_dtype
    f32 = jnp.float32

    # Time-major, batch padded to Bp, features padded to Fp; row t*Bp + b == x[b, t, :].
    x_t = jnp.transpose(x_bti, (1, 0, 2)).astype(f32)
    x_t = jnp.pad(x_t, ((0, 0), (0, Bp - B), (0, Fp - F_in)))
    args = [x_t.reshape(T * Bp, Fp).astype(cdt)]

    for l, (w_ih, w_hh, b_ih, b_hh) in enumerate(params["lstm"]):
        wih_t = _reorder_gate_rows(w_ih.astype(f32)).T                 # (F_l, G)
        whh_t = _reorder_gate_rows(w_hh.astype(f32)).T                 # (H, G)
        b = _reorder_gate_rows((b_ih + b_hh).astype(f32)).reshape(1, G)
        if l == 0:
            wih_rows = jnp.pad(wih_t, ((0, Fp - F_in), (0, 0)))        # (Fp, G)
        else:
            # Layer l>=1 consumes the previous layer's h, carried in lanes [3H:4H).
            wih_rows = jnp.pad(wih_t, ((3 * H, 0), (0, 0)))            # (G, G)
        whh_rows = jnp.pad(whh_t, ((3 * H, 0), (0, 0)))                # (G, G)
        b_rows = jnp.pad(b, ((0, 7), (0, 0)))                          # (8, G)
        args.append(jnp.concatenate([wih_rows, whh_rows, b_rows], axis=0).astype(cdt))

    # Fold the 3 conv taps + Linear into one (3H, O) weight (exact up to fp reassoc).
    lin_wt = params["lin_w"].astype(f32).T                             # (H, O)
    w_head = jnp.concatenate(
        [params["conv_w"][:, :, k].astype(f32).T @ lin_wt for k in range(3)], axis=0)
    b_head = (params["conv_b"].astype(f32) @ lin_wt
              + params["lin_b"].astype(f32)).reshape(1, O)
    w_head = jnp.pad(w_head, ((0, 0), (0, Op - O)))
    b_head = jnp.pad(b_head, ((0, 7), (0, Op - O)))
    args.append(jnp.concatenate([w_head, b_head], axis=0).astype(cdt))

    # Advisory cost estimate for the XLA scheduler.
    flops, f_rows = 0, Fp
    for _ in range(layers):
        flops += 2 * (T * Bp) * f_rows * G + T * 2 * Bp * G * G
        f_rows = G
    flops += 2 * Bp * (3 * H) * Op
    transcendentals = layers * T * 2 * Bp * G
    bytes_accessed = sum(int(a.size) * a.dtype.itemsize for a in args) + Bp * Op * 4

    kernel = functools.partial(
        _fused_kernel, hidden=H, layers=layers, seq_len=T, batch=B,
        batch_pad=Bp, cdt=cdt, roll_up=_roll_shifts_up())

    out = pl.pallas_call(
        kernel,
        out_shape=jax.ShapeDtypeStruct((Bp, Op), f32),
        in_specs=[pl.BlockSpec(memory_space=pltpu.MemorySpace.VMEM)] * len(args),
        out_specs=pl.BlockSpec(memory_space=pltpu.MemorySpace.VMEM),
        cost_estimate=pl.CostEstimate(flops=flops,
                                      transcendentals=transcendentals,
                                      bytes_accessed=bytes_accessed),
    )(*args)
    return out[:B, :O]


# ------------------------------ params ---------------------------------------

def init_params(key, input_size, hidden, layers, output_size):
    params = {"lstm": []}
    k = 1.0 / jnp.sqrt(hidden)
    keys = jax.random.split(key, 4 * layers + 4)
    ki = 0
    for l in range(layers):
        in_l = input_size if l == 0 else hidden
        w_ih = jax.random.uniform(keys[ki], (4 * hidden, in_l), minval=-k, maxval=k); ki += 1
        w_hh = jax.random.uniform(keys[ki], (4 * hidden, hidden), minval=-k, maxval=k); ki += 1
        b_ih = jax.random.uniform(keys[ki], (4 * hidden,), minval=-k, maxval=k); ki += 1
        b_hh = jax.random.uniform(keys[ki], (4 * hidden,), minval=-k, maxval=k); ki += 1
        params["lstm"].append((w_ih, w_hh, b_ih, b_hh))
    kc = 1.0 / jnp.sqrt(hidden * 3.0)
    params["conv_w"] = jax.random.uniform(keys[ki], (hidden, hidden, 3), minval=-kc, maxval=kc); ki += 1
    params["conv_b"] = jax.random.uniform(keys[ki], (hidden,), minval=-kc, maxval=kc); ki += 1
    kl = 1.0 / jnp.sqrt(hidden)
    params["lin_w"] = jax.random.uniform(keys[ki], (output_size, hidden), minval=-kl, maxval=kl); ki += 1
    params["lin_b"] = jax.random.uniform(keys[ki], (output_size,), minval=-kl, maxval=kl); ki += 1
    return params


# --------------------------- pure-JAX reference ------------------------------

def reference_forward(x_bti, params):
    h = jnp.transpose(x_bti, (1, 0, 2)).astype(jnp.float32)
    for (w_ih, w_hh, b_ih, b_hh) in params["lstm"]:
        H = w_hh.shape[1]
        B = h.shape[1]

        def step(carry, x_t, w_ih=w_ih, w_hh=w_hh, b=(b_ih + b_hh), H=H):
            hh, cc = carry
            g = x_t @ w_ih.T + hh @ w_hh.T + b
            i = jax.nn.sigmoid(g[:, :H]); f = jax.nn.sigmoid(g[:, H:2 * H])
            gg = jnp.tanh(g[:, 2 * H:3 * H]); o = jax.nn.sigmoid(g[:, 3 * H:])
            cc = f * cc + i * gg
            hh = o * jnp.tanh(cc)
            return (hh, cc), hh

        (_, _), h = lax.scan(step, (jnp.zeros((B, H)), jnp.zeros((B, H))), h)
    last = h[-1]                                                  # (B, H)
    hp = jnp.pad(last, ((1, 1), (0, 0)))                          # conv over the batch axis
    B = last.shape[0]
    y = (hp[0:B] @ params["conv_w"][:, :, 0].T
         + hp[1:B + 1] @ params["conv_w"][:, :, 1].T
         + hp[2:B + 2] @ params["conv_w"][:, :, 2].T
         + params["conv_b"])
    z = y @ params["lin_w"].T + params["lin_b"]
    return jnp.where(z >= 0, z, 0.2 * z)


# ----------------------------------- main ------------------------------------

if __name__ == "__main__":
    B, T, INPUT, HIDDEN, LAYERS, OUT = 2, 8, 4, 32, 2, 8

    key = jax.random.PRNGKey(0)
    k_x, k_p = jax.random.split(key)
    x = jax.random.normal(k_x, (B, T, INPUT), dtype=jnp.float32)
    params = init_params(k_p, INPUT, HIDDEN, LAYERS, OUT)

    ref = jax.block_until_ready(reference_forward(x, params))

    # f32 compute path: tight check of the structural changes (padding, quadrant
    # layout, one-pass nonlinearity, fused conv+linear head).
    out32 = jax.block_until_ready(
        stock_lstm_cnn_forward(x, params, compute_dtype=jnp.float32))
    assert out32.shape == (B, OUT), out32.shape
    assert jnp.allclose(out32, ref, atol=2e-3, rtol=2e-3), (out32, ref)

    # bf16 MXU-operand path (default perf path; f32 state/accumulation): looser check.
    out16 = jax.block_until_ready(
        stock_lstm_cnn_forward(x, params, compute_dtype=jnp.bfloat16))
    assert out16.shape == (B, OUT), out16.shape
    assert jnp.allclose(out16, ref, atol=5e-2, rtol=5e-2), (out16, ref)

    print("KERNEL_OK")
</pallas_src>

<mosaic_0001>
module attributes {stable_mosaic.version = 11 : i64} {
  func.func @probe(%arg0: memref<8x128xf32, #tpu.memory_space<vmem>>, %arg1: memref<8x128xf32, #tpu.memory_space<vmem>>) attributes {dimension_semantics = [], scalar_prefetch = 0 : i64, scratch_operands = 0 : i64, tpu.core_type = #tpu.core_type<tc>} {
    %c0 = arith.constant 0 : index
    %c0_0 = arith.constant 0 : index
    %0 = vector.load %arg0[%c0, %c0_0] : memref<8x128xf32, #tpu.memory_space<vmem>>, vector<8x128xf32>
    %c1_i32 = arith.constant 1 : i32
    %1 = tpu.dynamic_rotate %0 by %c1_i32 dim 1 : vector<8x128xf32>, i32 -> vector<8x128xf32>
    %c0_1 = arith.constant 0 : index
    %c0_2 = arith.constant 0 : index
    %2 = vector.load %arg1[%c0_1, %c0_2] : memref<8x128xf32, #tpu.memory_space<vmem>>, vector<8x128xf32>
    tpu.vector_store %arg1[%c0_1, %c0_2], %1 {strides = array<i32>} : memref<8x128xf32, #tpu.memory_space<vmem>>, vector<8x128xf32>,
    return
  }
}

</mosaic_0001>

<llo_original>
// kernel: tpu_custom_call.1
$region0: #{tpu_custom_call.1}
  #allocation0 [shape = 'u32[]', space=smem, size = 0x4, offset = 0x4, fixed_abs, tag = 'smem constant byte address 0x4 - core index']
  #allocation1 [shape = 'u32[72,128]{1,0:T(1,128)}', space=vmem, size = 0x9000, scoped, tag = 'internal scratch']
  %s0 = inlined_call_operand.hbm [shape: f32[8,128], index: 0, kind: input, shape index: {}]
  %s1 = inlined_call_operand.hbm [shape: f32[8,128], index: 1, kind: output, shape index: {}]
  %s2 = sld [smem:[#allocation0]]
  $region18: #{tpu_custom_call.1} parent=0
    _
  %s4 = ssub.s32 1, %s2
  %s5 = scalar_select 0, %s4, %s2
  $region1: #{tpu_custom_call.1} parent=0
    #allocation2 [shape = 'u8[4096]{0}', space=vmem, size = 0x1000, scoped, tag = 'input window, operand 0, single buffered']
    #allocation3 [shape = 's32[1]{0}', space=sflag, size = 0x4, scoped, tag = 'scoped memory for tpu_custom_call.1']
    #allocation4 [shape = 's32[1]{0}', space=sflag, size = 0x4, scoped, tag = 'scoped memory for tpu_custom_call.1']
    #allocation5 [shape = 'u8[4096]{0}', space=vmem, size = 0x1000, scoped, tag = 'output window, operand 0, single buffered']
    %6 = vsyncpa [#allocation3], 0
    %7 = vsyncpa [#allocation4], 0
    // Predicated region
    $region2: #{tpu_custom_call.1} parent=1 // pred_check
      _
    $region3: #{tpu_custom_call.1} parent=1 // pred_check_branch
      %9 = sbr.rel (0) target = $region5
    $region4: #{tpu_custom_call.1} parent=1 // pred_region
      %11 = vsyncadd [#allocation3], 0
      %s13 = sshll.u32 %s0, 4
      %s14 = int_to_ptr.hbm [resolvable:$true] %s13
      %s15 = sshll.u32 [#allocation2], 4
      %s16 = int_to_ptr.vmem [resolvable:$true] %s15
      %18 = dma.hbm_to_vmem [thread:$0]  %s14, 128, %s16, [#allocation3]
    $region5: #{tpu_custom_call.1} parent=1 // pred_fallthru
      _
    // Predicated region
    $region6: #{tpu_custom_call.1} parent=1 // pred_check
      _
    $region7: #{tpu_custom_call.1} parent=1 // pred_check_branch
      %20 = sbr.rel (0) target = $region9
    $region8: #{tpu_custom_call.1} parent=1 // pred_region
      %22 = dma.done [#allocation3], 128
    $region9: #{tpu_custom_call.1} parent=1 // pred_fallthru
      _
    %v23 = vld [vmem:[#allocation2] sm:$0xff]
    %24 = vrot.lane.b32.xlu0 %v23, 1
    %v25 = vpop.permute.xlu0 %24
    %26 = vst [vmem:[#allocation5] sm:$0xff] %v25
    // Predicated region
    $region10: #{tpu_custom_call.1} parent=1 // pred_check
      _
    $region11: #{tpu_custom_call.1} parent=1 // pred_check_branch
      %28 = sbr.rel (0) target = $region13
    $region12: #{tpu_custom_call.1} parent=1 // pred_region
      %30 = vsyncadd [#allocation4], 0
      %s32 = sshll.u32 [#allocation5], 4
      %s33 = int_to_ptr.vmem [resolvable:$true] %s32
      %s34 = sshll.u32 %s1, 4
      %s35 = int_to_ptr.hbm [resolvable:$true] %s34
      %37 = dma.vmem_to_hbm [thread:$0]  %s33, 128, %s35, [#allocation4]
    $region13: #{tpu_custom_call.1} parent=1 // pred_fallthru
      _
    // Predicated region
    $region14: #{tpu_custom_call.1} parent=1 // pred_check
      _
    $region15: #{tpu_custom_call.1} parent=1 // pred_check_branch
      %39 = sbr.rel (0) target = $region17
    $region16: #{tpu_custom_call.1} parent=1 // pred_region
      %41 = dma.done [#allocation4], 128
    $region17: #{tpu_custom_call.1} parent=1 // pred_fallthru
      _
    %42 = vsyncpa [#allocation3], 1
    %43 = vsyncpa [#allocation4], 1

</llo_original>
